<compile_context>
chip_gen: v5e
topology: v5e:2x2
jax: 0.10.0
libtpu: 0.0.40
codegen_flags: <defaults>
</compile_context>

<pallas_src>
import functools

import jax
import jax.numpy as jnp
from jax.experimental import pallas as pl
from jax.experimental.pallas import tpu as pltpu

BN_EPS = 1e-5
PACK = 8  # original rows packed per lane-dense row


def _round_up(x, m):
    return ((x + m - 1) // m) * m


def _stats_kernel(src_ref, dst_ref, wrep_ref, acc_ref, *, m_rows, n_half):
    """Accumulate per-feature sum / sum-of-squares of src@W and dst@W.

    src_ref/dst_ref: [tile_m, 8*in_dim] packed rows (8 original rows per row).
    wrep_ref:        [8*in_dim, 8*hid] block-diagonal-replicated W (resident).
    acc_ref:         [1, 4, 8*hid] accumulator for this core partition.
    """
    p = pl.program_id(0)
    i = pl.program_id(1)

    @pl.when(i == 0)
    def _():
        acc_ref[...] = jnp.zeros_like(acc_ref)

    # Logical tile index.  The index_map clamps the DMA in-bounds; duplicated /
    # out-of-range tiles and the ragged tail are zero-masked here instead of
    # padding the inputs in HBM.
    tile_m = src_ref.shape[0]
    t = p * n_half + i
    rows_left = m_rows - t * tile_m                      # may be <= 0
    row_ids = jax.lax.broadcasted_iota(jnp.int32, (tile_m, 1), 0)
    valid = row_ids < rows_left
    xsrc = jnp.where(valid, src_ref[...], 0.0)
    xdst = jnp.where(valid, dst_ref[...], 0.0)

    # Two MXU matmuls against the same resident weight (no concat copy).
    # Zero rows contribute exactly zero to the bias-free sums below.
    xs = jnp.dot(xsrc, wrep_ref[...], preferred_element_type=jnp.float32)
    xd = jnp.dot(xdst, wrep_ref[...], preferred_element_type=jnp.float32)

    upd = jnp.concatenate(
        [
            jnp.sum(xs, axis=0, keepdims=True),
            jnp.sum(xs * xs, axis=0, keepdims=True),
            jnp.sum(xd, axis=0, keepdims=True),
            jnp.sum(xd * xd, axis=0, keepdims=True),
        ],
        axis=0,
    )
    acc_ref[...] += upd[None]


def _apply_kernel(src_ref, dst_ref, v0_ref, v1_ref, sc_ref, out_ref):
    """logit = src@v0 + dst@v1 + c ; out = sigmoid(logit) * (1-ratio) + ratio.

    src_ref/dst_ref: [tile_m, 8*in_dim] packed rows.
    v0_ref/v1_ref:   [8*in_dim, 8] block-expanded folded vectors (resident).
    sc_ref:          SMEM [3] = (c, 1-ratio, ratio).
    out_ref:         [tile_m, 8] -- element (i, j) is original row 8*i + j.
    """
    logit = (
        jnp.dot(src_ref[...], v0_ref[...], preferred_element_type=jnp.float32)
        + jnp.dot(dst_ref[...], v1_ref[...], preferred_element_type=jnp.float32)
        + sc_ref[0]
    )
    out_ref[...] = jax.nn.sigmoid(logit) * sc_ref[1] + sc_ref[2]


def nefactor_forward(src, dst, w, b, gamma, beta, att_w, ratio_param, *, tile_n=None):
    """src, dst: [N, in_dim]; w: [in_dim, hid] (transposed vs torch Linear.weight);
    b/gamma/beta: [1, hid]; att_w: [2, hid] (row 0 -> x_src half, row 1 -> x_dst).
    Returns [N, 1] float32, matching NeFactor.forward (training-mode BN stats).
    Note: the Linear bias b cancels analytically inside batch-norm, so it is
    accepted for interface parity but never streamed through the kernels."""
    del b  # cancels out of BN(batch-stats) + the folded logit
    n, in_dim = src.shape
    hid = w.shape[1]
    f32 = jnp.float32

    if src.dtype != f32:
        src = src.astype(f32)
    if dst.dtype != f32:
        dst = dst.astype(f32)
    w = w.astype(f32)

    # Pack PACK=8 original rows per lane row: [N, in_dim] -> [N/8, 8*in_dim].
    # Row-major dim-merge reshape => layout-compatible, no HBM copy.
    n8 = _round_up(n, PACK)
    if n8 != n:
        # Rare ragged tail (< 8 rows): one small pad copy.  Zero rows contribute
        # zero to the bias-free stats and their outputs are sliced off below.
        src = jnp.pad(src, ((0, n8 - n), (0, 0)))
        dst = jnp.pad(dst, ((0, n8 - n), (0, 0)))
    m_rows = n8 // PACK
    lanes = PACK * in_dim
    src_p = src.reshape(m_rows, lanes)
    dst_p = dst.reshape(m_rows, lanes)

    # Packed-row tile: >= ~8 pipelined grid steps for large N, capped at 512
    # packed rows (4096 original rows) so the per-tile footprint stays ~1-2 MiB.
    if tile_n is None:
        tm = max(128, min(512, _round_up(pl.cdiv(m_rows, 8), 8)))
    else:
        assert tile_n % (8 * PACK) == 0, "tile_n must be a multiple of 64"
        tm = tile_n // PACK
    tm = min(tm, m_rows)
    n_tiles = pl.cdiv(m_rows, tm)
    n_half = pl.cdiv(n_tiles, 2)      # pass-1 tiles per core partition

    eye = jnp.eye(PACK, dtype=f32)
    # Block-diagonal-replicated W: row 16*j+k, col 32*j+h = w[k, h].
    w_rep = (eye[:, None, :, None] * w[None, :, None, :]).reshape(lanes, PACK * hid)

    data_spec1 = pl.BlockSpec(
        (tm, lanes),
        lambda p, i: (jnp.minimum(p * n_half + i, n_tiles - 1), 0))

    # ---- pass 1: per-feature sum / sum-of-squares of src@W and dst@W --------
    # Leading size-2 "parallel" axis -> on v7x both TensorCores each stream
    # half of the tiles into their own partial-stats slot (summed in the fold).
    stats = pl.pallas_call(
        functools.partial(_stats_kernel, m_rows=m_rows, n_half=n_half),
        grid=(2, n_half),
        in_specs=[
            data_spec1,
            data_spec1,
            pl.BlockSpec((lanes, PACK * hid), lambda p, i: (0, 0)),   # resident
        ],
        out_specs=pl.BlockSpec((1, 4, PACK * hid), lambda p, i: (p, 0, 0)),
        out_shape=jax.ShapeDtypeStruct((2, 4, PACK * hid), f32),
        compiler_params=pltpu.CompilerParams(
            dimension_semantics=("parallel", "arbitrary")),
    )(src_p, dst_p, w_rep)

    # ---- tiny fold (O(in_dim*hid)): BN affine + attention + linear ----------
    st = jnp.sum(stats, axis=0)                       # merge core partitions
    s1s = jnp.sum(st[0].reshape(PACK, hid), axis=0)   # sum of src@W (bias-free)
    s2s = jnp.sum(st[1].reshape(PACK, hid), axis=0)
    s1d = jnp.sum(st[2].reshape(PACK, hid), axis=0)
    s2d = jnp.sum(st[3].reshape(PACK, hid), axis=0)

    g1 = gamma[0].astype(f32)
    be1 = beta[0].astype(f32)
    a0 = att_w[0].astype(f32)
    a1 = att_w[1].astype(f32)
    inv_n = 1.0 / n                                   # true batch size (biased BN variance)
    mean_s = s1s * inv_n                              # Linear bias cancels out of the fold
    mean_d = s1d * inv_n
    # NOTE: E[x^2] - E[x]^2 in f32 can lose precision when |mean| >> std; fine
    # for normalized inputs (clamped at 0 so rsqrt stays defined).
    var_s = jnp.maximum(s2s * inv_n - mean_s * mean_s, 0.0)
    var_d = jnp.maximum(s2d * inv_n - mean_d * mean_d, 0.0)
    u0 = g1 * jax.lax.rsqrt(var_s + BN_EPS) * a0
    u1 = g1 * jax.lax.rsqrt(var_d + BN_EPS) * a1
    v0 = w @ u0                                       # [in_dim]
    v1 = w @ u1
    c = jnp.sum(be1 * (a0 + a1)) - jnp.dot(mean_s, u0) - jnp.dot(mean_d, u1)

    r = jnp.asarray(ratio_param, f32)
    scalars = jnp.stack([c.astype(f32), 1.0 - r, r])  # SMEM: (c, scale, offset)
    # Block-expanded folded vectors for the natural-orientation matvec:
    # row 16*j+k, col j = v[k]  (tiny [8*in_dim, 8] matrices, VMEM-resident).
    v0_rep = (eye[:, None, :] * v0[None, :, None]).reshape(lanes, PACK)
    v1_rep = (eye[:, None, :] * v1[None, :, None]).reshape(lanes, PACK)

    data_spec2 = pl.BlockSpec((tm, lanes), lambda i: (i, 0))
    # ---- pass 2: streaming matvecs + sigmoid + output affine ----------------
    # (If pass-2 ever shows exposed DMA, pipeline_mode=pl.Buffered(3) on the
    #  two data specs is the knob -- per-tile compute here is tiny.)
    out2d = pl.pallas_call(
        _apply_kernel,
        grid=(n_tiles,),
        in_specs=[
            data_spec2,
            data_spec2,
            pl.BlockSpec((lanes, PACK), lambda i: (0, 0)),            # resident
            pl.BlockSpec((lanes, PACK), lambda i: (0, 0)),            # resident
            pl.BlockSpec(memory_space=pltpu.MemorySpace.SMEM),
        ],
        out_specs=pl.BlockSpec((tm, PACK), lambda i: (i, 0)),
        out_shape=jax.ShapeDtypeStruct((m_rows, PACK), f32),
        compiler_params=pltpu.CompilerParams(dimension_semantics=("parallel",)),
    )(src_p, dst_p, v0_rep, v1_rep, scalars)

    return out2d.reshape(n8, 1)[:n]


def nefactor_reference(src, dst, w, b, gamma, beta, att_w, ratio_param):
    def bn(x):
        mean = jnp.mean(x, axis=0, keepdims=True)
        var = jnp.mean((x - mean) ** 2, axis=0, keepdims=True)
        return (x - mean) / jnp.sqrt(var + BN_EPS) * gamma + beta

    xs = bn(src @ w + b)
    xd = bn(dst @ w + b)
    logit = (xs * att_w[0:1]).sum(-1, keepdims=True) + \
            (xd * att_w[1:2]).sum(-1, keepdims=True)
    ratio = jax.nn.sigmoid(logit)
    return ratio * (1.0 - ratio_param) + ratio_param


if __name__ == "__main__":
    key = jax.random.PRNGKey(0)
    N, IN_DIM, HID_DIM = 8, 16, 32
    RATIO_PARAM = 0.3  # param['ratio']

    ks = jax.random.split(key, 9)
    src = jax.random.normal(ks[0], (N, IN_DIM), jnp.float32)
    dst = jax.random.normal(ks[1], (N, IN_DIM), jnp.float32)

    lim = 1.0 / (IN_DIM ** 0.5)
    w = jax.random.uniform(ks[2], (IN_DIM, HID_DIM), jnp.float32, -lim, lim)
    b = jax.random.uniform(ks[3], (1, HID_DIM), jnp.float32, -lim, lim)
    gamma = 1.0 + 0.1 * jax.random.normal(ks[4], (1, HID_DIM), jnp.float32)
    beta = 0.1 * jax.random.normal(ks[5], (1, HID_DIM), jnp.float32)
    lim_a = 1.0 / ((2 * HID_DIM) ** 0.5)
    att_w = jax.random.uniform(ks[6], (2, HID_DIM), jnp.float32, -lim_a, lim_a)

    fwd = jax.jit(nefactor_forward, static_argnames=("tile_n",))

    out = jax.block_until_ready(fwd(src, dst, w, b, gamma, beta, att_w, RATIO_PARAM))
    ref = nefactor_reference(src, dst, w, b, gamma, beta, att_w, RATIO_PARAM)
    assert out.shape == (N, 1)
    assert jnp.allclose(out, ref, atol=2e-5, rtol=2e-5), \
        float(jnp.max(jnp.abs(out - ref)))

    # Multi-tile check: exercises the 2-way pass-1 core split, in-kernel tail
    # masking, partial input/output blocks and multiple pipelined grid steps.
    N2 = 600
    src2 = jax.random.normal(ks[7], (N2, IN_DIM), jnp.float32)
    dst2 = jax.random.normal(ks[8], (N2, IN_DIM), jnp.float32)
    out2 = jax.block_until_ready(
        fwd(src2, dst2, w, b, gamma, beta, att_w, RATIO_PARAM, tile_n=256))
    ref2 = nefactor_reference(src2, dst2, w, b, gamma, beta, att_w, RATIO_PARAM)
    assert out2.shape == (N2, 1)
    assert jnp.allclose(out2, ref2, atol=2e-5, rtol=2e-5), \
        float(jnp.max(jnp.abs(out2 - ref2)))

    print("KERNEL_OK")
</pallas_src>

<mosaic_0001>
module attributes {stable_mosaic.version = 11 : i64} {
  func.func @_stats_kernel(%arg0: i32, %arg1: i32, %arg2: memref<1x128xf32, #tpu.memory_space<vmem>>, %arg3: memref<1x128xf32, #tpu.memory_space<vmem>>, %arg4: memref<128x256xf32, #tpu.memory_space<vmem>>, %arg5: memref<1x4x256xf32, #tpu.memory_space<vmem>>) attributes {dimension_semantics = [#tpu.dimension_semantics<parallel>, #tpu.dimension_semantics<arbitrary>], iteration_bounds = array<i64: 2, 1>, scalar_prefetch = 0 : i64, scratch_operands = 0 : i64, tpu.core_type = #tpu.core_type<tc>, window_params = [{transform_indices = @transform_0, window_bounds = array<i64: 1, 128>}, {transform_indices = @transform_1, window_bounds = array<i64: 1, 128>}, {pipeline_mode = #tpu.pipeline_mode<synchronous>, transform_indices = @transform_2, window_bounds = array<i64: 128, 256>}, {transform_indices = @transform_3, window_bounds = array<i64: 1, 4, 256>}]} {
    %c0_i32 = arith.constant 0 : i32
    %0 = arith.cmpi eq, %arg1, %c0_i32 : i32
    %1 = arith.extui %0 : i1 to i32
    %c0_i32_0 = arith.constant 0 : i32
    %2 = arith.cmpi ne, %1, %c0_i32_0 : i32
    scf.if %2 {
      %cst_23 = arith.constant 0.000000e+00 : f32
      %39 = vector.broadcast %cst_23 : f32 to vector<1x4x256xf32>
      %c0_24 = arith.constant 0 : index
      %c0_25 = arith.constant 0 : index
      %c0_26 = arith.constant 0 : index
      %40 = vector.load %arg5[%c0_24, %c0_25, %c0_26] : memref<1x4x256xf32, #tpu.memory_space<vmem>>, vector<1x4x256xf32>
      tpu.vector_store %arg5[%c0_24, %c0_25, %c0_26], %39 {strides = array<i32>} : memref<1x4x256xf32, #tpu.memory_space<vmem>>, vector<1x4x256xf32>,
    } else {
    }
    %c1_i32 = arith.constant 1 : i32
    %3 = arith.muli %arg0, %c1_i32 : i32
    %4 = arith.addi %3, %arg1 : i32
    %c1_i32_1 = arith.constant 1 : i32
    %5 = arith.muli %4, %c1_i32_1 : i32
    %c1_i32_2 = arith.constant 1 : i32
    %6 = arith.subi %c1_i32_2, %5 : i32
    %7 = tpu.iota {dimensions = array<i32: 0>} : vector<1x1xi32>
    %8 = vector.broadcast %6 : i32 to vector<1x1xi32>
    %9 = arith.cmpi slt, %7, %8 : vector<1x1xi32>
    %c0 = arith.constant 0 : index
    %c0_3 = arith.constant 0 : index
    %10 = vector.load %arg2[%c0, %c0_3] : memref<1x128xf32, #tpu.memory_space<vmem>>, vector<1x128xf32>
    %cst = arith.constant 0.000000e+00 : f32
    %11 = vector.shape_cast %9 : vector<1x1xi1> to vector<1x1xi1>
    %12 = vector.broadcast %11 : vector<1x1xi1> to vector<1x128xi1>
    %13 = vector.broadcast %cst : f32 to vector<1x128xf32>
    %14 = arith.select %12, %10, %13 : vector<1x128xi1>, vector<1x128xf32>
    %c0_4 = arith.constant 0 : index
    %c0_5 = arith.constant 0 : index
    %15 = vector.load %arg3[%c0_4, %c0_5] : memref<1x128xf32, #tpu.memory_space<vmem>>, vector<1x128xf32>
    %cst_6 = arith.constant 0.000000e+00 : f32
    %16 = vector.shape_cast %9 : vector<1x1xi1> to vector<1x1xi1>
    %17 = vector.broadcast %16 : vector<1x1xi1> to vector<1x128xi1>
    %18 = vector.broadcast %cst_6 : f32 to vector<1x128xf32>
    %19 = arith.select %17, %15, %18 : vector<1x128xi1>, vector<1x128xf32>
    %c0_7 = arith.constant 0 : index
    %c0_8 = arith.constant 0 : index
    %20 = vector.load %arg4[%c0_7, %c0_8] : memref<128x256xf32, #tpu.memory_space<vmem>>, vector<128x256xf32>
    %cst_9 = arith.constant dense<0.000000e+00> : vector<1x256xf32>
    %21 = tpu.matmul %14, %20, %cst_9 {dimension_numbers = #tpu.dot_dimension_numbers<[1], [0], [0], [1], [0, 0, 1, 1], [], []>} : vector<1x128xf32>, vector<128x256xf32>, vector<1x256xf32> -> vector<1x256xf32>
    %c0_10 = arith.constant 0 : index
    %c0_11 = arith.constant 0 : index
    %22 = vector.load %arg4[%c0_10, %c0_11] : memref<128x256xf32, #tpu.memory_space<vmem>>, vector<128x256xf32>
    %cst_12 = arith.constant dense<0.000000e+00> : vector<1x256xf32>
    %23 = tpu.matmul %19, %22, %cst_12 {dimension_numbers = #tpu.dot_dimension_numbers<[1], [0], [0], [1], [0, 0, 1, 1], [], []>} : vector<1x128xf32>, vector<128x256xf32>, vector<1x256xf32> -> vector<1x256xf32>
    %cst_13 = arith.constant dense<0.000000e+00> : vector<256xf32>
    %24 = vector.multi_reduction <add>, %21, %cst_13 [0] : vector<1x256xf32> to vector<256xf32>
    %25 = vector.shape_cast %24 : vector<256xf32> to vector<1x256xf32>
    %26 = arith.mulf %21, %21 : vector<1x256xf32>
    %cst_14 = arith.constant dense<0.000000e+00> : vector<256xf32>
    %27 = vector.multi_reduction <add>, %26, %cst_14 [0] : vector<1x256xf32> to vector<256xf32>
    %28 = vector.shape_cast %27 : vector<256xf32> to vector<1x256xf32>
    %cst_15 = arith.constant dense<0.000000e+00> : vector<256xf32>
    %29 = vector.multi_reduction <add>, %23, %cst_15 [0] : vector<1x256xf32> to vector<256xf32>
    %30 = vector.shape_cast %29 : vector<256xf32> to vector<1x256xf32>
    %31 = arith.mulf %23, %23 : vector<1x256xf32>
    %cst_16 = arith.constant dense<0.000000e+00> : vector<256xf32>
    %32 = vector.multi_reduction <add>, %31, %cst_16 [0] : vector<1x256xf32> to vector<256xf32>
    %33 = vector.shape_cast %32 : vector<256xf32> to vector<1x256xf32>
    %34 = tpu.concatenate %25, %28, %30, %33 in 0 : vector<1x256xf32>, vector<1x256xf32>, vector<1x256xf32>, vector<1x256xf32> -> vector<4x256xf32>
    %c0_17 = arith.constant 0 : index
    %c0_18 = arith.constant 0 : index
    %c0_19 = arith.constant 0 : index
    %35 = vector.load %arg5[%c0_17, %c0_18, %c0_19] : memref<1x4x256xf32, #tpu.memory_space<vmem>>, vector<1x4x256xf32>
    %36 = vector.shape_cast %34 : vector<4x256xf32> to vector<1x4x256xf32>
    %37 = arith.addf %35, %36 : vector<1x4x256xf32>
    %c0_20 = arith.constant 0 : index
    %c0_21 = arith.constant 0 : index
    %c0_22 = arith.constant 0 : index
    %38 = vector.load %arg5[%c0_20, %c0_21, %c0_22] : memref<1x4x256xf32, #tpu.memory_space<vmem>>, vector<1x4x256xf32>
    tpu.vector_store %arg5[%c0_20, %c0_21, %c0_22], %37 {strides = array<i32>} : memref<1x4x256xf32, #tpu.memory_space<vmem>>, vector<1x4x256xf32>,
    return
  }
  func.func @transform_0(%arg0: i32, %arg1: i32) -> (i32, i32) {
    %c1_i32 = arith.constant 1 : i32
    %0 = arith.muli %arg0, %c1_i32 : i32
    %1 = arith.addi %0, %arg1 : i32
    %c0_i32 = arith.constant 0 : i32
    %2 = arith.minsi %1, %c0_i32 : i32
    %c0_i32_0 = arith.constant 0 : i32
    %c0_i32_1 = arith.constant 0 : i32
    return %2, %c0_i32_0 : i32, i32
  }
  func.func @transform_1(%arg0: i32, %arg1: i32) -> (i32, i32) {
    %c1_i32 = arith.constant 1 : i32
    %0 = arith.muli %arg0, %c1_i32 : i32
    %1 = arith.addi %0, %arg1 : i32
    %c0_i32 = arith.constant 0 : i32
    %2 = arith.minsi %1, %c0_i32 : i32
    %c0_i32_0 = arith.constant 0 : i32
    %c0_i32_1 = arith.constant 0 : i32
    return %2, %c0_i32_0 : i32, i32
  }
  func.func @transform_2(%arg0: i32, %arg1: i32) -> (i32, i32) {
    %c0_i32 = arith.constant 0 : i32
    %c0_i32_0 = arith.constant 0 : i32
    %c0_i32_1 = arith.constant 0 : i32
    return %c0_i32, %c0_i32_0 : i32, i32
  }
  func.func @transform_3(%arg0: i32, %arg1: i32) -> (i32, i32, i32) {
    %c0_i32 = arith.constant 0 : i32
    %c0_i32_0 = arith.constant 0 : i32
    %c0_i32_1 = arith.constant 0 : i32
    return %arg0, %c0_i32, %c0_i32_0 : i32, i32, i32
  }
}

module attributes {stable_mosaic.version = 11 : i64} {
  func.func @_apply_kernel(%arg0: i32, %arg1: memref<1x128xf32, #tpu.memory_space<vmem>>, %arg2: memref<1x128xf32, #tpu.memory_space<vmem>>, %arg3: memref<128x8xf32, #tpu.memory_space<vmem>>, %arg4: memref<128x8xf32, #tpu.memory_space<vmem>>, %arg5: memref<3xf32, #tpu.memory_space<smem>>, %arg6: memref<1x8xf32, #tpu.memory_space<vmem>>) attributes {dimension_semantics = [#tpu.dimension_semantics<parallel>], iteration_bounds = array<i64: 1>, scalar_prefetch = 0 : i64, scratch_operands = 0 : i64, tpu.core_type = #tpu.core_type<tc>, window_params = [{transform_indices = @transform_0, window_bounds = array<i64: 1, 128>}, {transform_indices = @transform_1, window_bounds = array<i64: 1, 128>}, {pipeline_mode = #tpu.pipeline_mode<synchronous>, transform_indices = @transform_2, window_bounds = array<i64: 128, 8>}, {pipeline_mode = #tpu.pipeline_mode<synchronous>, transform_indices = @transform_3, window_bounds = array<i64: 128, 8>}, {transform_indices = @transform_4, window_bounds = array<i64: 3>}, {transform_indices = @transform_5, window_bounds = array<i64: 1, 8>}]} {
    %c0 = arith.constant 0 : index
    %c0_0 = arith.constant 0 : index
    %0 = vector.load %arg1[%c0, %c0_0] : memref<1x128xf32, #tpu.memory_space<vmem>>, vector<1x128xf32>
    %c0_1 = arith.constant 0 : index
    %c0_2 = arith.constant 0 : index
    %1 = vector.load %arg3[%c0_1, %c0_2] : memref<128x8xf32, #tpu.memory_space<vmem>>, vector<128x8xf32>
    %cst = arith.constant dense<0.000000e+00> : vector<1x8xf32>
    %2 = tpu.matmul %0, %1, %cst {dimension_numbers = #tpu.dot_dimension_numbers<[1], [0], [0], [1], [0, 0, 1, 1], [], []>} : vector<1x128xf32>, vector<128x8xf32>, vector<1x8xf32> -> vector<1x8xf32>
    %c0_3 = arith.constant 0 : index
    %c0_4 = arith.constant 0 : index
    %3 = vector.load %arg2[%c0_3, %c0_4] : memref<1x128xf32, #tpu.memory_space<vmem>>, vector<1x128xf32>
    %c0_5 = arith.constant 0 : index
    %c0_6 = arith.constant 0 : index
    %4 = vector.load %arg4[%c0_5, %c0_6] : memref<128x8xf32, #tpu.memory_space<vmem>>, vector<128x8xf32>
    %cst_7 = arith.constant dense<0.000000e+00> : vector<1x8xf32>
    %5 = tpu.matmul %3, %4, %cst_7 {dimension_numbers = #tpu.dot_dimension_numbers<[1], [0], [0], [1], [0, 0, 1, 1], [], []>} : vector<1x128xf32>, vector<128x8xf32>, vector<1x8xf32> -> vector<1x8xf32>
    %6 = arith.addf %2, %5 : vector<1x8xf32>
    %c0_8 = arith.constant 0 : index
    %7 = memref.load %arg5[%c0_8] : memref<3xf32, #tpu.memory_space<smem>>
    %8 = vector.broadcast %7 : f32 to vector<1x8xf32>
    %9 = arith.addf %6, %8 : vector<1x8xf32>
    %10 = arith.negf %9 : vector<1x8xf32>
    %11 = math.exp %10 : vector<1x8xf32>
    %cst_9 = arith.constant 1.000000e+00 : f32
    %12 = vector.broadcast %cst_9 : f32 to vector<1x8xf32>
    %13 = arith.addf %12, %11 : vector<1x8xf32>
    %14 = arith.divf %12, %13 : vector<1x8xf32>
    %c1 = arith.constant 1 : index
    %15 = memref.load %arg5[%c1] : memref<3xf32, #tpu.memory_space<smem>>
    %16 = vector.broadcast %15 : f32 to vector<1x8xf32>
    %17 = arith.mulf %14, %16 : vector<1x8xf32>
    %c2 = arith.constant 2 : index
    %18 = memref.load %arg5[%c2] : memref<3xf32, #tpu.memory_space<smem>>
    %19 = vector.broadcast %18 : f32 to vector<1x8xf32>
    %20 = arith.addf %17, %19 : vector<1x8xf32>
    %c0_10 = arith.constant 0 : index
    %c0_11 = arith.constant 0 : index
    %21 = vector.load %arg6[%c0_10, %c0_11] : memref<1x8xf32, #tpu.memory_space<vmem>>, vector<1x8xf32>
    tpu.vector_store %arg6[%c0_10, %c0_11], %20 {strides = array<i32>} : memref<1x8xf32, #tpu.memory_space<vmem>>, vector<1x8xf32>,
    return
  }
  func.func @transform_0(%arg0: i32) -> (i32, i32) {
    %c0_i32 = arith.constant 0 : i32
    %c0_i32_0 = arith.constant 0 : i32
    return %arg0, %c0_i32 : i32, i32
  }
  func.func @transform_1(%arg0: i32) -> (i32, i32) {
    %c0_i32 = arith.constant 0 : i32
    %c0_i32_0 = arith.constant 0 : i32
    return %arg0, %c0_i32 : i32, i32
  }
  func.func @transform_2(%arg0: i32) -> (i32, i32) {
    %c0_i32 = arith.constant 0 : i32
    %c0_i32_0 = arith.constant 0 : i32
    %c0_i32_1 = arith.constant 0 : i32
    return %c0_i32, %c0_i32_0 : i32, i32
  }
  func.func @transform_3(%arg0: i32) -> (i32, i32) {
    %c0_i32 = arith.constant 0 : i32
    %c0_i32_0 = arith.constant 0 : i32
    %c0_i32_1 = arith.constant 0 : i32
    return %c0_i32, %c0_i32_0 : i32, i32
  }
  func.func @transform_4(%arg0: i32) -> i32 {
    %c0_i32 = arith.constant 0 : i32
    %c0_i32_0 = arith.constant 0 : i32
    return %c0_i32 : i32
  }
  func.func @transform_5(%arg0: i32) -> (i32, i32) {
    %c0_i32 = arith.constant 0 : i32
    %c0_i32_0 = arith.constant 0 : i32
    return %arg0, %c0_i32 : i32, i32
  }
}

</mosaic_0001>

<llo_original>
// kernel: squeeze.8
$region0: #{squeeze.8}
  %s0 = inlined_call_operand.vmem [shape: f32[256], index: 0, kind: input, shape index: {}]
  %s1 = inlined_call_operand.vmem [shape: f32[8,32], index: 1, kind: output, shape index: {}]
  $region1: #{squeeze.8} parent=0
    #allocation0 [shape = 'u8[4096]{0}', space=vmem, size = 0x1000, scoped, tag = 'scoped mem for input reshape']
    %s3 = ssub.s32 4, 1
    %v4 = vld [vmem:[%s0] sm:%s3]
    %5 = vst [vmem:[#allocation0] sm:%s3] %v4
    %v6 = vld [vmem:[#allocation0] sm:$0x3]
    %vm7 = vcmask 261120
    %8 = vst.msk [vmem:[%s1] ss:$4 sm:$0x3] %vm7, %v6
    %v9 = vld [vmem:[#allocation0] sm:$0x3]
    %10 = vrot.lane.b32.xlu0 %v9, 96
    %v11 = vpop.permute.xlu0 %10
    %vm12 = vcmask 261120
    %s13 = scalar_lea.vmem %s1, 1
    %14 = vst.msk [vmem:[%s13] ss:$4 sm:$0x3] %vm12, %v11
    %v15 = vld [vmem:[#allocation0] sm:$0x3]
    %16 = vrot.lane.b32.xlu0 %v15, 64
    %v17 = vpop.permute.xlu0 %16
    %vm18 = vcmask 261120
    %s19 = scalar_lea.vmem %s1, 2
    %20 = vst.msk [vmem:[%s19] ss:$4 sm:$0x3] %vm18, %v17
    %v21 = vld [vmem:[#allocation0] sm:$0x3]
    %22 = vrot.lane.b32.xlu0 %v21, 32
    %v23 = vpop.permute.xlu0 %22
    %vm24 = vcmask 261120
    %s25 = scalar_lea.vmem %s1, 3
    %26 = vst.msk [vmem:[%s25] ss:$4 sm:$0x3] %vm24, %v23

// kernel: nefactor_forward.2
$region0: #{nefactor_forward.2}
  #allocation0 [shape = 'u32[]', space=smem, size = 0x4, offset = 0x4, fixed_abs, tag = 'smem constant byte address 0x4 - core index']
  #allocation1 [shape = 'u32[72,128]{1,0:T(1,128)}', space=vmem, size = 0x9000, scoped, tag = 'internal scratch']
  %s0 = inlined_call_operand.vmem [shape: f32[1,128], index: 0, kind: input, shape index: {}]
  %s1 = inlined_call_operand.vmem [shape: f32[1,128], index: 1, kind: input, shape index: {}]
  %s2 = inlined_call_operand.vmem [shape: f32[128,256], index: 2, kind: input, shape index: {}]
  %s3 = inlined_call_operand.vmem [shape: f32[2,4,256], index: 3, kind: output, shape index: {}]
  %s4 = sld [smem:[#allocation0]]
  $region49: #{nefactor_forward.2} parent=0
    _
  %s6 = ssub.s32 1, %s4
  %s7 = scalar_select 0, %s6, %s4
  loop: start=0, step=1, limit=4
  $region2: #{nefactor_forward.2} parent=0 // loop_pre_header
    _
  $region3: #{nefactor_forward.2} parent=0 // loop_header
    %s9 = sphi 0, %s13
    %p10 = scmp.ge.s32.totalorder %s9, 4
    %s16 = sphi 0, %s28
    %s17 = sphi 0, %s24
    %s18 = sphi 0, %s16
    %s19 = sphi 0, %s17
    %s20 = sphi 0, %s18
    %s21 = sphi 0, %s19
    %s37 = sphi 0, %s39
    %s40 = sphi 0, %s37
    %s41 = sphi 0, %s40
    %s57 = sphi 0, %s41
    %s69 = sphi 0, %s71
    %s72 = sphi 0, %s69
    %s73 = sphi 0, %s72
    %s89 = sphi 0, %s73
    %s93 = sphi 0, %s93
    %s95 = sphi 0, %s93
    %s96 = sphi 0, %s95
    %s110 = sphi 0, %s96
    %s116 = sphi 0, %s118
    %s119 = sphi 0, %s116
    %s120 = sphi 0, %s119
    %s136 = sphi 0, %s120
  $region4: #{nefactor_forward.2} parent=0 // loop_header_branch
    %12 = sbr.rel (%p10) target = $region8
  $region5: #{nefactor_forward.2} parent=0 // loop_body
    %s14 = ssub.s32 %s9, 1
    %s15 = ssub.s32 %s9, 2
    %s22 = sadd.s32 1, %s17
    %p23 = scmp.ge.s32.totalorder %s22, 1
    %s24 = scalar_select %p23, 0, %s22
    %s25 = sadd.s32 1, %s16
    %s26 = scalar_select %p23, %s25, %s16
    %p27 = scmp.ge.s32.totalorder %s26, 2
    %s28 = scalar_select %p27, 0, %s26
    %s29 = sadd.s32 %s16, %s17
    %p30 = scmp.lt.s32.totalorder %s29, 0
    %s31 = scalar_select %p30, %s29, 0
    %s32 = sadd.s32 %s28, %s24
    %p33 = scmp.lt.s32.totalorder %s32, 0
    %s34 = scalar_select %p33, %s32, 0
    %s35 = ssub.s32 %s31, %s34
    %p36 = scmp.eq.s32.totalorder %s35, 0
    %s38 = sadd.s32 %s37, 1
    %s39 = scalar_select %p36, %s37, %s38
    %p42 = pneg %p36
    %p43 = scmp.eq.s32.totalorder %s9, 1
    %p44 = por %p42, %p43
    %p45 = scmp.ne.s32.totalorder %s37, %s40
    %p46 = scmp.eq.s32.totalorder %s9, 0
    %p47 = por %p45, %p46
    %p48 = scmp.ne.s32.totalorder %s37, %s40
    %p49 = scmp.eq.s32.totalorder %s14, 1
    %p50 = por %p48, %p49
    %p51 = scmp.ne.s32.totalorder %s40, %s41
    %p52 = scmp.eq.s32.totalorder %s14, 0
    %p53 = por %p51, %p52
    %p54 = scmp.ne.s32.totalorder %s40, %s41
    %p55 = scmp.eq.s32.totalorder %s15, 1
    %p56 = por %p54, %p55
    %p58 = scmp.ne.s32.totalorder %s41, %s57
    %p59 = scmp.eq.s32.totalorder %s15, 0
    %p60 = por %p58, %p59
    %s61 = sadd.s32 %s16, %s17
    %p62 = scmp.lt.s32.totalorder %s61, 0
    %s63 = scalar_select %p62, %s61, 0
    %s64 = sadd.s32 %s28, %s24
    %p65 = scmp.lt.s32.totalorder %s64, 0
    %s66 = scalar_select %p65, %s64, 0
    %s67 = ssub.s32 %s63, %s66
    %p68 = scmp.eq.s32.totalorder %s67, 0
    %s70 = sadd.s32 %s69, 1
    %s71 = scalar_select %p68, %s69, %s70
    %p74 = pneg %p68
    %p75 = scmp.eq.s32.totalorder %s9, 1
    %p76 = por %p74, %p75
    %p77 = scmp.ne.s32.totalorder %s69, %s72
    %p78 = scmp.eq.s32.totalorder %s9, 0
    %p79 = por %p77, %p78
    %p80 = scmp.ne.s32.totalorder %s69, %s72
    %p81 = scmp.eq.s32.totalorder %s14, 1
    %p82 = por %p80, %p81
    %p83 = scmp.ne.s32.totalorder %s72, %s73
    %p84 = scmp.eq.s32.totalorder %s14, 0
    %p85 = por %p83, %p84
    %p86 = scmp.ne.s32.totalorder %s72, %s73
    %p87 = scmp.eq.s32.totalorder %s15, 1
    %p88 = por %p86, %p87
    %p90 = scmp.ne.s32.totalorder %s73, %s89
    %p91 = scmp.eq.s32.totalorder %s15, 0
    %p92 = por %p90, %p91
    %s94 = sadd.s32 %s93, 1
    %p97 = scmp.eq.s32.totalorder %s9, 1
    %p98 = scmp.ne.s32.totalorder %s93, %s95
    %p99 = scmp.eq.s32.totalorder %s9, 0
    %p100 = por %p98, %p99
    %p101 = scmp.ne.s32.totalorder %s93, %s95
    %p102 = scmp.eq.s32.totalorder %s14, 1
    %p103 = por %p101, %p102
    %p104 = scmp.ne.s32.totalorder %s95, %s96
    %p105 = scmp.eq.s32.totalorder %s14, 0
    %p106 = por %p104, %p105
    %p107 = scmp.ne.s32.totalorder %s95, %s96
    %p108 = scmp.eq.s32.totalorder %s15, 1
    %p109 = por %p107, %p108
    %p111 = scmp.ne.s32.totalorder %s96, %s110
    %p112 = scmp.eq.s32.totalorder %s15, 0
    %p113 = por %p111, %p112
    %s114 = ssub.s32 %s16, %s28
    %p115 = scmp.eq.s32.totalorder %s114, 0
    %s117 = sadd.s32 %s116, 1
    %s118 = scalar_select %p115, %s116, %s117
    %p121 = pneg %p115
    %p122 = scmp.eq.s32.totalorder %s9, 1
    %p123 = por %p121, %p122
    %p124 = scmp.ne.s32.totalorder %s116, %s119
    %p125 = scmp.eq.s32.totalorder %s9, 0
    %p126 = por %p124, %p125
    %p127 = scmp.ne.s32.totalorder %s116, %s119
    %p128 = scmp.eq.s32.totalorder %s14, 1
    %p129 = por %p127, %p128
    %p130 = scmp.ne.s32.totalorder %s119, %s120
    %p131 = scmp.eq.s32.totalorder %s14, 0
    %p132 = por %p130, %p131
    %p133 = scmp.ne.s32.totalorder %s119, %s120
    %p134 = scmp.eq.s32.totalorder %s15, 1
    %p135 = por %p133, %p134
    %p137 = scmp.ne.s32.totalorder %s120, %s136
    %p138 = scmp.eq.s32.totalorder %s15, 0
    %p139 = por %p137, %p138
    %p140 = scmp.le.s32.totalorder 1, %s9
    %p141 = scmp.lt.s32.totalorder %s9, 3
    %p142 = pnand %p140, %p141
    %p143 = pneg %p142
    // Predicated region
    $region9: #{nefactor_forward.2} parent=5 // pred_check
      _
    $region10: #{nefactor_forward.2} parent=5 // pred_check_branch
      %145 = sbr.rel (%p142) target = $region12
    $region11: #{nefactor_forward.2} parent=5 // pred_region
      %s146 = ssub.s32 %s9, 1
      // Predicated region
      $region13: #{nefactor_forward.2} parent=11 // pred_check
        %p147 = pneg %p106
      $region14: #{nefactor_forward.2} parent=11 // pred_check_branch
        %149 = sbr.rel (%p147) target = $region16
      $region15: #{nefactor_forward.2} parent=11 // pred_region
        _
      $region16: #{nefactor_forward.2} parent=11 // pred_fallthru
        _
    $region12: #{nefactor_forward.2} parent=5 // pred_fallthru
      _
    %p150 = scmp.lt.s32.totalorder %s9, 2
    // Predicated region
    $region17: #{nefactor_forward.2} parent=5 // pred_check
      %p151 = pneg %p150
    $region18: #{nefactor_forward.2} parent=5 // pred_check_branch
      %153 = sbr.rel (%p151) target = $region20
    $region19: #{nefactor_forward.2} parent=5 // pred_region
      // Predicated region
      $region21: #{nefactor_forward.2} parent=19 // pred_check
        %p154 = pneg %p47
      $region22: #{nefactor_forward.2} parent=19 // pred_check_branch
        %156 = sbr.rel (%p154) target = $region24
      $region23: #{nefactor_forward.2} parent=19 // pred_region
        %s157 = sadd.s32 %s16, %s17
        %p158 = scmp.lt.s32.totalorder %s157, 0
        %s159 = scalar_select %p158, %s157, 0
        %p160 = scmp.lt.s32.totalorder %s159, 0
        %s161 = scalar_select %p160, %s159, 0
        %s162 = scalar_lea.vmem %s0, %s161
        %s163 = sadd.s32 %s16, %s17
        %p164 = scmp.lt.s32.totalorder %s163, 0
        %s165 = scalar_select %p164, %s163, 0
      $region24: #{nefactor_forward.2} parent=19 // pred_fallthru
        _
      // Predicated region
      $region25: #{nefactor_forward.2} parent=19 // pred_check
        %p166 = pneg %p79
      $region26: #{nefactor_forward.2} parent=19 // pred_check_branch
        %168 = sbr.rel (%p166) target = $region28
      $region27: #{nefactor_forward.2} parent=19 // pred_region
        %s169 = sadd.s32 %s16, %s17
        %p170 = scmp.lt.s32.totalorder %s169, 0
        %s171 = scalar_select %p170, %s169, 0
        %p172 = scmp.lt.s32.totalorder %s171, 0
        %s173 = scalar_select %p172, %s171, 0
        %s174 = scalar_lea.vmem %s1, %s173
        %s175 = sadd.s32 %s16, %s17
        %p176 = scmp.lt.s32.totalorder %s175, 0
        %s177 = scalar_select %p176, %s175, 0
      $region28: #{nefactor_forward.2} parent=19 // pred_fallthru
        _
    $region20: #{nefactor_forward.2} parent=5 // pred_fallthru
      _
    %p178 = scmp.le.s32.totalorder 1, %s9
    %p179 = scmp.lt.s32.totalorder %s9, 3
    %p180 = pnand %p178, %p179
    %p181 = pneg %p180
    // Predicated region
    $region29: #{nefactor_forward.2} parent=5 // pred_check
      _
    $region30: #{nefactor_forward.2} parent=5 // pred_check_branch
      %183 = sbr.rel (%p180) target = $region32
    $region31: #{nefactor_forward.2} parent=5 // pred_region
      %s184 = ssub.s32 %s9, 1
      %s185 = sadd.s32 %s18, %s19
      %p186 = scmp.lt.s32.totalorder %s185, 0
      %s187 = scalar_select %p186, %s185, 0
      %p188 = scmp.lt.s32.totalorder %s187, 0
      %s189 = scalar_select %p188, %s187, 0
      %s190 = scalar_lea.vmem %s0, %s189
      %p191 = pneg %p53
      %p192 = pneg %p50
      %s193 = sadd.s32 %s18, %s19
      %p194 = scmp.lt.s32.totalorder %s193, 0
      %s195 = scalar_select %p194, %s193, 0
      %p196 = scmp.lt.s32.totalorder %s195, 0
      %s197 = scalar_select %p196, %s195, 0
      %s198 = scalar_lea.vmem %s1, %s197
      %p199 = pneg %p85
      %p200 = pneg %p82
      %p201 = pneg %p106
      %p202 = pneg %p103
      %p203 = pneg %p132
      %p204 = pneg %p129
      %p205 = scmp.lt.s32.totalorder %s18, 1
      %s206 = scalar_select %p205, %s18, 1
      %s207 = smul.addr %s206, 2
      %s208 = smul.addr %s207, 4
      %s209 = scalar_lea.vmem %s3, %s208
      %s210 = sadd.s32 %s18, %s19
      %p211 = scmp.lt.s32.totalorder %s210, 0
      %s212 = scalar_select %p211, %s210, 0
      %p213 = scmp.lt.s32.totalorder %s212, 0
      %s214 = scalar_select %p213, %s212, 0
      %s215 = scalar_lea.vmem %s0, %s214
      %s216 = sadd.s32 %s18, %s19
      %p217 = scmp.lt.s32.totalorder %s216, 0
      %s218 = scalar_select %p217, %s216, 0
      %s219 = sadd.s32 %s18, %s19
      %p220 = scmp.lt.s32.totalorder %s219, 0
      %s221 = scalar_select %p220, %s219, 0
      %p222 = scmp.lt.s32.totalorder %s221, 0
      %s223 = scalar_select %p222, %s221, 0
      %s224 = scalar_lea.vmem %s1, %s223
      %s225 = sadd.s32 %s18, %s19
      %p226 = scmp.lt.s32.totalorder %s225, 0
      %s227 = scalar_select %p226, %s225, 0
      %p228 = scmp.lt.s32.totalorder %s18, 1
      %s229 = scalar_select %p228, %s18, 1
      %s230 = smul.addr %s229, 2
      %s231 = smul.addr %s230, 4
      %s232 = scalar_lea.vmem %s3, %s231
      %p233 = scmp.eq.s32.totalorder %s19, 0
      // Predicated region
      $region33: #{nefactor_forward.2} parent=31 // pred_check
        %p234 = pneg %p233
      $region34: #{nefactor_forward.2} parent=31 // pred_check_branch
        %236 = sbr.rel (%p234) target = $region36
      $region35: #{nefactor_forward.2} parent=31 // pred_region
        %237 = vst [vmem:[%s232] sm:$0xff] 0.0
      $region36: #{nefactor_forward.2} parent=31 // pred_fallthru
        _
      %s238 = sadd.s32 %s18, %s19
      %s239 = ssub.s32 1, %s238
      %v240 = vlaneseq
      %v241 = vshrl.u32 %v240, 7
      %v242 = vstv %s239
      %vm243 = vcmp.lt.s32.totalorder %v241, %v242
      %v244 = vld [vmem:[%s215] sm:$0x1]
      %v245 = vsel %vm243, 1, 0
      %vm246 = vcmp.eq.s32.totalorder %v245, 1
      %v247 = vsel %vm246, %v244, 0.0
      %v248 = vld [vmem:[%s224] sm:$0x1]
      %v249 = vsel %vm246, %v248, 0.0
      %v250 = vld [vmem:[%s2] sm:$0xff]
      %v251 = vld [vmem:[%s2 + $0x8] sm:$0xff]
      %v252 = vld [vmem:[%s2 + $0x10] sm:$0xff]
      %v253 = vld [vmem:[%s2 + $0x18] sm:$0xff]
      %v254 = vld [vmem:[%s2 + $0x20] sm:$0xff]
      %v255 = vld [vmem:[%s2 + $0x28] sm:$0xff]
      %v256 = vld [vmem:[%s2 + $0x30] sm:$0xff]
      %v257 = vld [vmem:[%s2 + $0x38] sm:$0xff]
      %v258 = vld [vmem:[%s2 + $0x40] sm:$0xff]
      %v259 = vld [vmem:[%s2 + $0x48] sm:$0xff]
      %v260 = vld [vmem:[%s2 + $0x50] sm:$0xff]
      %v261 = vld [vmem:[%s2 + $0x58] sm:$0xff]
      %v262 = vld [vmem:[%s2 + $0x60] sm:$0xff]
      %v263 = vld [vmem:[%s2 + $0x68] sm:$0xff]
      %v264 = vld [vmem:[%s2 + $0x70] sm:$0xff]
      %v265 = vld [vmem:[%s2 + $0x78] sm:$0xff]
      %v266 = vld [vmem:[%s2 + $0x80] sm:$0xff]
      %v267 = vld [vmem:[%s2 + $0x88] sm:$0xff]
      %v268 = vld [vmem:[%s2 + $0x90] sm:$0xff]
      %v269 = vld [vmem:[%s2 + $0x98] sm:$0xff]
      %v270 = vld [vmem:[%s2 + $0xa0] sm:$0xff]
      %v271 = vld [vmem:[%s2 + $0xa8] sm:$0xff]
      %v272 = vld [vmem:[%s2 + $0xb0] sm:$0xff]
      %v273 = vld [vmem:[%s2 + $0xb8] sm:$0xff]
      %v274 = vld [vmem:[%s2 + $0xc0] sm:$0xff]
      %v275 = vld [vmem:[%s2 + $0xc8] sm:$0xff]
      %v276 = vld [vmem:[%s2 + $0xd0] sm:$0xff]
      %v277 = vld [vmem:[%s2 + $0xd8] sm:$0xff]
      %v278 = vld [vmem:[%s2 + $0xe0] sm:$0xff]
      %v279 = vld [vmem:[%s2 + $0xe8] sm:$0xff]
      %v280 = vld [vmem:[%s2 + $0xf0] sm:$0xff]
      %v281 = vld [vmem:[%s2 + $0xf8] sm:$0xff]
      %282 = vmatpush.msra.mxu0 %v280
      %283 = vmatpush.msra.mxu0 %v278
      %284 = vmatpush.msra.mxu0 %v276
      %285 = vmatpush.msra.mxu0 %v274
      %286 = vmatpush.msra.mxu0 %v272
      %287 = vmatpush.msra.mxu0 %v270
      %288 = vmatpush.msra.mxu0 %v268
      %289 = vmatpush.msra.mxu0 %v266
      %290 = vmatpush.msra.mxu0 %v264
      %291 = vmatpush.msra.mxu0 %v262
      %292 = vmatpush.msra.mxu0 %v260
      %293 = vmatpush.msra.mxu0 %v258
      %294 = vmatpush.msra.mxu0 %v256
      %295 = vmatpush.msra.mxu0 %v254
      %296 = vmatpush.msra.mxu0 %v252
      %297 = vmatpush.msra.mxu0 %v250
      %298 = vmatmul.f32.gmra.mxu0 %v247
      %v299 = vpop.f32.mrf.mxu0
      %v300 = vadd.f32 0.0, %v299
      %301 = vdwg.mxu0
      %302 = vmatpush.msra.mxu0 %v281
      %303 = vmatpush.msra.mxu0 %v279
      %304 = vmatpush.msra.mxu0 %v277
      %305 = vmatpush.msra.mxu0 %v275
      %306 = vmatpush.msra.mxu0 %v273
      %307 = vmatpush.msra.mxu0 %v271
      %308 = vmatpush.msra.mxu0 %v269
      %309 = vmatpush.msra.mxu0 %v267
      %310 = vmatpush.msra.mxu0 %v265
      %311 = vmatpush.msra.mxu0 %v263
      %312 = vmatpush.msra.mxu0 %v261
      %313 = vmatpush.msra.mxu0 %v259
      %314 = vmatpush.msra.mxu0 %v257
      %315 = vmatpush.msra.mxu0 %v255
      %316 = vmatpush.msra.mxu0 %v253
      %317 = vmatpush.msra.mxu0 %v251
      %318 = vmatmul.f32.gmra.mxu0 %v247
      %v319 = vpop.f32.mrf.mxu0
      %v320 = vadd.f32 0.0, %v319
      %321 = vdwg.mxu0
      %322 = vmatpush.msra.mxu0 %v280
      %323 = vmatpush.msra.mxu0 %v278
      %324 = vmatpush.msra.mxu0 %v276
      %325 = vmatpush.msra.mxu0 %v274
      %326 = vmatpush.msra.mxu0 %v272
      %327 = vmatpush.msra.mxu0 %v270
      %328 = vmatpush.msra.mxu0 %v268
      %329 = vmatpush.msra.mxu0 %v266
      %330 = vmatpush.msra.mxu0 %v264
      %331 = vmatpush.msra.mxu0 %v262
      %332 = vmatpush.msra.mxu0 %v260
      %333 = vmatpush.msra.mxu0 %v258
      %334 = vmatpush.msra.mxu0 %v256
      %335 = vmatpush.msra.mxu0 %v254
      %336 = vmatpush.msra.mxu0 %v252
      %337 = vmatpush.msra.mxu0 %v250
      %338 = vmatmul.f32.gmra.mxu0 %v249
      %v339 = vpop.f32.mrf.mxu0
      %v340 = vadd.f32 0.0, %v339
      %341 = vdwg.mxu0
      %342 = vmatpush.msra.mxu0 %v281
      %343 = vmatpush.msra.mxu0 %v279
      %344 = vmatpush.msra.mxu0 %v277
      %345 = vmatpush.msra.mxu0 %v275
      %346 = vmatpush.msra.mxu0 %v273
      %347 = vmatpush.msra.mxu0 %v271
      %348 = vmatpush.msra.mxu0 %v269
      %349 = vmatpush.msra.mxu0 %v267
      %350 = vmatpush.msra.mxu0 %v265
      %351 = vmatpush.msra.mxu0 %v263
      %352 = vmatpush.msra.mxu0 %v261
      %353 = vmatpush.msra.mxu0 %v259
      %354 = vmatpush.msra.mxu0 %v257
      %355 = vmatpush.msra.mxu0 %v255
      %356 = vmatpush.msra.mxu0 %v253
      %357 = vmatpush.msra.mxu0 %v251
      %358 = vmatmul.f32.gmra.mxu0 %v249
      %v359 = vpop.f32.mrf.mxu0
      %v360 = vadd.f32 0.0, %v359
      %361 = vdwg.mxu0
      %v362 = vadd.f32 %v300, 0.0
      %v363 = vadd.f32 %v320, 0.0
      %v364 = vmul.f32 %v300, %v300
      %v365 = vmul.f32 %v320, %v320
      %v366 = vadd.f32 %v364, 0.0
      %v367 = vadd.f32 %v365, 0.0
      %v368 = vadd.f32 %v340, 0.0
      %v369 = vadd.f32 %v360, 0.0
      %v370 = vmul.f32 %v340, %v340
      %v371 = vmul.f32 %v360, %v360
      %v372 = vadd.f32 %v370, 0.0
      %v373 = vadd.f32 %v371, 0.0
      %v376 = vrot.slane %v366, 7
      %v377 = vrot.slane %v367, 7
      %v382 = vrot.slane %v368, 6
      %v383 = vrot.slane %v369, 6
      %v388 = vrot.slane %v372, 5
      %v389 = vrot.slane %v373, 5
      %vm392 = vcmask 1040384
      %v393 = vsel %vm392, %v362, %v376
      %v394 = vsel %vm392, %v363, %v377
      %vm395 = vcmask 1041408
      %v396 = vsel %vm395, %v393, %v382
      %v397 = vsel %vm395, %v394, %v383
      %vm398 = vcmask 1042432
      %v399 = vsel %vm398, %v396, %v388
      %v400 = vsel %vm398, %v397, %v389
      %v401 = vld [vmem:[%s232] sm:$0xff]
      %v404 = vrot.slane %v400, 4
      %vm405 = vcmask 1043456
      %v406 = vsel %vm405, %v399, %v404
      %v408 = vadd.f32 %v401, %v406
      %409 = vst [vmem:[%s232] sm:$0xff] %v408
      %p410 = scmp.lt.s32.totalorder %s18, 1
      %s411 = scalar_select %p410, %s18, 1
      %s412 = smul.addr %s411, 2
      %s413 = smul.addr %s412, 4
      %s414 = scalar_lea.vmem %s3, %s413
      // Predicated region
      $region37: #{nefactor_forward.2} parent=31 // pred_check
        %p415 = pneg %p129
      $region38: #{nefactor_forward.2} parent=31 // pred_check_branch
        %417 = sbr.rel (%p415) target = $region40
      $region39: #{nefactor_forward.2} parent=31 // pred_region
        _
      $region40: #{nefactor_forward.2} parent=31 // pred_fallthru
        _
    $region32: #{nefactor_forward.2} parent=5 // pred_fallthru
      _
    %p418 = scmp.le.s32.totalorder 2, %s9
    // Predicated region
    $region41: #{nefactor_forward.2} parent=5 // pred_check
      %p419 = pneg %p418
    $region42: #{nefactor_forward.2} parent=5 // pred_check_branch
      %421 = sbr.rel (%p419) target = $region44
    $region43: #{nefactor_forward.2} parent=5 // pred_region
      %s422 = ssub.s32 %s9, 2
      // Predicated region
      $region45: #{nefactor_forward.2} parent=43 // pred_check
        %p423 = pneg %p135
      $region46: #{nefactor_forward.2} parent=43 // pred_check_branch
        %425 = sbr.rel (%p423) target = $region48
      $region47: #{nefactor_forward.2} parent=43 // pred_region
        %p426 = scmp.lt.s32.totalorder %s20, 1
        %s427 = scalar_select %p426, %s20, 1
        %s428 = smul.addr %s427, 2
        %s429 = smul.addr %s428, 4
        %s430 = scalar_lea.vmem %s3, %s429
      $region48: #{nefactor_forward.2} parent=43 // pred_fallthru
        _
    $region44: #{nefactor_forward.2} parent=5 // pred_fallthru
      _
  $region6: #{nefactor_forward.2} parent=0 // loop_footer
    %s13 = sadd.s32 1, %s9
  $region7: #{nefactor_forward.2} parent=0 // loop_footer_branch
    %8 = sbr.rel target = $region3
  $region8: #{nefactor_forward.2} parent=0 // loop_exit
    _

// kernel: nefactor_forward.3
$region0: #{nefactor_forward.3}
  #allocation0 [shape = 'u32[]', space=smem, size = 0x4, offset = 0x4, fixed_abs, tag = 'smem constant byte address 0x4 - core index']
  #allocation1 [shape = 'u32[72,128]{1,0:T(1,128)}', space=vmem, size = 0x9000, scoped, tag = 'internal scratch']
  %s0 = inlined_call_operand.vmem [shape: f32[1,128], index: 0, kind: input, shape index: {}]
  %s1 = inlined_call_operand.vmem [shape: f32[1,128], index: 1, kind: input, shape index: {}]
  %s2 = inlined_call_operand.vmem [shape: f32[128,8], index: 2, kind: input, shape index: {}]
  %s3 = inlined_call_operand.vmem [shape: f32[128,8], index: 3, kind: input, shape index: {}]
  %s4 = inlined_call_operand.vmem [shape: f32[3], index: 4, kind: input, shape index: {}]
  %s5 = inlined_call_operand.hbm [shape: f32[1,8], index: 5, kind: output, shape index: {}]
  %s6 = sld [smem:[#allocation0]]
  $region34: #{nefactor_forward.3} parent=0
    _
  %s8 = ssub.s32 1, %s6
  %s9 = scalar_select 0, %s8, %s6
  $region1: #{nefactor_forward.3} parent=0
    #allocation2 [shape = 'u8[512]{0}', space=smem, size = 0x200, scoped, tag = 'input window, operand 4, single buffered']
    #allocation3 [shape = 's32[1]{0}', space=sflag, size = 0x4, scoped, tag = 'scoped memory for nefactor_forward.3']
    #allocation4 [shape = 's32[1]{0}', space=sflag, size = 0x4, scoped, tag = 'scoped memory for nefactor_forward.3']
    #allocation5 [shape = 'u8[512]{0}', space=vmem, size = 0x400, scoped, tag = 'output window, operand 0, single buffered']
    %10 = vsyncpa [#allocation4], 0
    %11 = vsyncpa [#allocation3], 0
    // Predicated region
    $region2: #{nefactor_forward.3} parent=1 // pred_check
      _
    $region3: #{nefactor_forward.3} parent=1 // pred_check_branch
      %13 = sbr.rel (0) target = $region5
    $region4: #{nefactor_forward.3} parent=1 // pred_region
      _
    $region5: #{nefactor_forward.3} parent=1 // pred_fallthru
      _
    // Predicated region
    $region6: #{nefactor_forward.3} parent=1 // pred_check
      _
    $region7: #{nefactor_forward.3} parent=1 // pred_check_branch
      %15 = sbr.rel (0) target = $region9
    $region8: #{nefactor_forward.3} parent=1 // pred_region
      _
    $region9: #{nefactor_forward.3} parent=1 // pred_fallthru
      _
    // Predicated region
    $region10: #{nefactor_forward.3} parent=1 // pred_check
      _
    $region11: #{nefactor_forward.3} parent=1 // pred_check_branch
      %17 = sbr.rel (0) target = $region13
    $region12: #{nefactor_forward.3} parent=1 // pred_region
      _
    $region13: #{nefactor_forward.3} parent=1 // pred_fallthru
      _
    // Predicated region
    $region14: #{nefactor_forward.3} parent=1 // pred_check
      _
    $region15: #{nefactor_forward.3} parent=1 // pred_check_branch
      %19 = sbr.rel (0) target = $region17
    $region16: #{nefactor_forward.3} parent=1 // pred_region
      _
    $region17: #{nefactor_forward.3} parent=1 // pred_fallthru
      _
    // Predicated region
    $region18: #{nefactor_forward.3} parent=1 // pred_check
      _
    $region19: #{nefactor_forward.3} parent=1 // pred_check_branch
      %21 = sbr.rel (0) target = $region21
    $region20: #{nefactor_forward.3} parent=1 // pred_region
      %23 = vsyncadd [#allocation4], 0
      %s25 = sshll.u32 %s4, 4
      %s26 = int_to_ptr.vmem [resolvable:$true] %s25
      %28 = dma.vmem_to_smem %s26, 16, [#allocation2], [#allocation4]
    $region21: #{nefactor_forward.3} parent=1 // pred_fallthru
      _
    // Predicated region
    $region22: #{nefactor_forward.3} parent=1 // pred_check
      _
    $region23: #{nefactor_forward.3} parent=1 // pred_check_branch
      %30 = sbr.rel (0) target = $region25
    $region24: #{nefactor_forward.3} parent=1 // pred_region
      %32 = dma.done [#allocation4], 16
    $region25: #{nefactor_forward.3} parent=1 // pred_fallthru
      _
    %33 = sfence
    %v34 = vld [vmem:[%s0] sm:$0x1]
    %v35 = vld [vmem:[%s2] sm:$0xff]
    %v36 = vld [vmem:[%s2 + $0x8] sm:$0xff]
    %v37 = vld [vmem:[%s2 + $0x10] sm:$0xff]
    %v38 = vld [vmem:[%s2 + $0x18] sm:$0xff]
    %v39 = vld [vmem:[%s2 + $0x20] sm:$0xff]
    %v40 = vld [vmem:[%s2 + $0x28] sm:$0xff]
    %v41 = vld [vmem:[%s2 + $0x30] sm:$0xff]
    %v42 = vld [vmem:[%s2 + $0x38] sm:$0xff]
    %v43 = vld [vmem:[%s2 + $0x40] sm:$0xff]
    %v44 = vld [vmem:[%s2 + $0x48] sm:$0xff]
    %v45 = vld [vmem:[%s2 + $0x50] sm:$0xff]
    %v46 = vld [vmem:[%s2 + $0x58] sm:$0xff]
    %v47 = vld [vmem:[%s2 + $0x60] sm:$0xff]
    %v48 = vld [vmem:[%s2 + $0x68] sm:$0xff]
    %v49 = vld [vmem:[%s2 + $0x70] sm:$0xff]
    %v50 = vld [vmem:[%s2 + $0x78] sm:$0xff]
    %v51 = vld [vmem:[%s1] sm:$0x1]
    %v52 = vld [vmem:[%s3] sm:$0xff]
    %v53 = vld [vmem:[%s3 + $0x8] sm:$0xff]
    %v54 = vld [vmem:[%s3 + $0x10] sm:$0xff]
    %v55 = vld [vmem:[%s3 + $0x18] sm:$0xff]
    %v56 = vld [vmem:[%s3 + $0x20] sm:$0xff]
    %v57 = vld [vmem:[%s3 + $0x28] sm:$0xff]
    %v58 = vld [vmem:[%s3 + $0x30] sm:$0xff]
    %v59 = vld [vmem:[%s3 + $0x38] sm:$0xff]
    %v60 = vld [vmem:[%s3 + $0x40] sm:$0xff]
    %v61 = vld [vmem:[%s3 + $0x48] sm:$0xff]
    %v62 = vld [vmem:[%s3 + $0x50] sm:$0xff]
    %v63 = vld [vmem:[%s3 + $0x58] sm:$0xff]
    %v64 = vld [vmem:[%s3 + $0x60] sm:$0xff]
    %v65 = vld [vmem:[%s3 + $0x68] sm:$0xff]
    %v66 = vld [vmem:[%s3 + $0x70] sm:$0xff]
    %v67 = vld [vmem:[%s3 + $0x78] sm:$0xff]
    %68 = vmatpush.msra.mxu0 %v67
    %69 = vmatpush.msra.mxu0 %v66
    %70 = vmatpush.msra.mxu0 %v65
    %71 = vmatpush.msra.mxu0 %v64
    %72 = vmatpush.msra.mxu0 %v63
    %73 = vmatpush.msra.mxu0 %v62
    %74 = vmatpush.msra.mxu0 %v61
    %75 = vmatpush.msra.mxu0 %v60
    %76 = vmatpush.msra.mxu0 %v59
    %77 = vmatpush.msra.mxu0 %v58
    %78 = vmatpush.msra.mxu0 %v57
    %79 = vmatpush.msra.mxu0 %v56
    %80 = vmatpush.msra.mxu0 %v55
    %81 = vmatpush.msra.mxu0 %v54
    %82 = vmatpush.msra.mxu0 %v53
    %83 = vmatpush.msra.mxu0 %v52
    %84 = vmatmul.f32.gmra.mxu0 %v51
    %v85 = vpop.f32.mrf.mxu0
    %v86 = vadd.f32 0.0, %v85
    %87 = vdwg.mxu0
    %88 = vmatpush.msra.mxu0 %v50
    %89 = vmatpush.msra.mxu0 %v49
    %90 = vmatpush.msra.mxu0 %v48
    %91 = vmatpush.msra.mxu0 %v47
    %92 = vmatpush.msra.mxu0 %v46
    %93 = vmatpush.msra.mxu0 %v45
    %94 = vmatpush.msra.mxu0 %v44
    %95 = vmatpush.msra.mxu0 %v43
    %96 = vmatpush.msra.mxu0 %v42
    %97 = vmatpush.msra.mxu0 %v41
    %98 = vmatpush.msra.mxu0 %v40
    %99 = vmatpush.msra.mxu0 %v39
    %100 = vmatpush.msra.mxu0 %v38
    %101 = vmatpush.msra.mxu0 %v37
    %102 = vmatpush.msra.mxu0 %v36
    %103 = vmatpush.msra.mxu0 %v35
    %104 = vmatmul.f32.gmra.mxu0 %v34
    %v105 = vpop.f32.mrf.mxu0
    %v106 = vadd.f32 %v86, %v105
    %107 = vdwg.mxu0
    %s108 = sld [smem:[#allocation2]]
    %v109 = vstv %s108
    %v110 = vadd.f32 %v106, %v109
    %v111 = vxor.u32 %v110, 2147483648
    %v112 = vmul.f32 %v111, 1.442695
    %v113 = vpow.pop %v112
    %v114 = vadd.f32 %v113, 1.0
    %v115 = vrcp.pop %v114
    %v116 = vmul.f32 %v114, %v115
    %v117 = vsub.f32 1.0, %v116
    %v118 = vmul.f32 %v115, %v117
    %v119 = vadd.f32 %v115, %v118
    %vm120 = vweird.f32 %v114
    %vm121 = vweird.f32 %v115
    %vm122 = vmor %vm120, %vm121
    %v123 = vsel %vm122, %v115, %v119
    %v124 = vand.u32 2147483647, %v114
    %vm125 = vcmp.eq.f32.partialorder %v124, 8.507059e+37
    %v126 = vand.u32 %v114, 2147483648
    %v127 = vor.u32 1.1754944e-38, %v126
    %v128 = vsel %vm125, %v127, %v123
    %v129 = vmul.f32 1.0, %v128
    %s130 = sld [smem:[#allocation2 + $0x1]]
    %v131 = vstv %s130
    %v132 = vmul.f32 %v129, %v131
    %s133 = sld [smem:[#allocation2 + $0x2]]
    %v134 = vstv %s133
    %v135 = vadd.f32 %v132, %v134
    %vm136 = vcmask 57344
    %137 = vst.msk [vmem:[#allocation5] sm:$0x1] %vm136, %v135
    // Predicated region
    $region26: #{nefactor_forward.3} parent=1 // pred_check
      _
    $region27: #{nefactor_forward.3} parent=1 // pred_check_branch
      %139 = sbr.rel (0) target = $region29
    $region28: #{nefactor_forward.3} parent=1 // pred_region
      %141 = vsyncadd [#allocation3], 0
      %s143 = sshll.u32 [#allocation5], 4
      %s144 = int_to_ptr.vmem [resolvable:$true] %s143
      %s145 = sshll.u32 %s5, 4
      %s146 = int_to_ptr.hbm [resolvable:$true] %s145
      %148 = dma.vmem_to_hbm [thread:$0]  %s144, 16, %s146, [#allocation3]
    $region29: #{nefactor_forward.3} parent=1 // pred_fallthru
      _
    // Predicated region
    $region30: #{nefactor_forward.3} parent=1 // pred_check
      _
    $region31: #{nefactor_forward.3} parent=1 // pred_check_branch
      %150 = sbr.rel (0) target = $region33
    $region32: #{nefactor_forward.3} parent=1 // pred_region
      %152 = dma.done [#allocation3], 16
    $region33: #{nefactor_forward.3} parent=1 // pred_fallthru
      _
    %153 = vsyncpa [#allocation3], 1
    %154 = vsyncpa [#allocation4], 1

</llo_original>
